<compile_context>
chip_gen: v5e
topology: v5e:2x2
jax: 0.10.0
libtpu: 0.0.40
codegen_flags: <defaults>
</compile_context>

<pallas_src>
import jax
import jax.numpy as jnp
from jax.experimental import pallas as pl
from jax.experimental.pallas import tpu as pltpu

INPUT_SIZE = 6
SUBLANE = 8
LANE = 128


def logreg_kernel(x_ref, wb_ref, o_ref):
    # x_ref : (6, 8, TL) VMEM — feature-major; batch split over 8 sublane
    #                           groups x TL lanes, i.e. fully dense vregs.
    # wb_ref: (7,)       SMEM — [w0 .. w5, bias] scalars.
    # o_ref : (8, TL)    VMEM — sublane- and lane-dense output slab.
    z = x_ref[0] * wb_ref[0]
    for f in range(1, INPUT_SIZE):                 # unrolled: 6 scalar*vector FMAs
        z = z + x_ref[f] * wb_ref[f]
    z = z + wb_ref[INPUT_SIZE]                     # bias
    # sigmoid(z) = 0.5 * tanh(0.5 * z) + 0.5 : single EUP transcendental, exact.
    o_ref[...] = (0.5 * jnp.tanh(0.5 * z) + 0.5).astype(o_ref.dtype)


def logistic_regression(x, weight, bias, *, block_lanes=16384):
    """sigmoid(x @ weight.T + bias).

    x: (B, INPUT_SIZE) f32 (torch layout); weight: (1, INPUT_SIZE); bias: (1,).
    Returns (B, 1).
    """
    B = int(x.shape[0])
    dtype = x.dtype

    # ---- layout: feature-major, batch spread over (8 sublane groups) x lanes ----
    Bg = -(-B // SUBLANE)                          # lanes per sublane group
    if B == SUBLANE * Bg:
        # One accepted transpose copy; the reshape afterwards is free (row-major view).
        x_r = jnp.transpose(x).reshape(INPUT_SIZE, SUBLANE, Bg)
    else:
        # Rare ragged-batch case: pad rows to a multiple of 8 *before* the single
        # transpose copy so XLA can fuse pad+transpose into one formatting pass.
        x_r = jnp.pad(x, ((0, SUBLANE * Bg - B), (0, 0)))
        x_r = jnp.transpose(x_r).reshape(INPUT_SIZE, SUBLANE, Bg)

    # Weights + bias as 7 SMEM scalars (read as sregs in-kernel).
    wb = jnp.concatenate(
        [jnp.asarray(weight, jnp.float32).reshape(-1),
         jnp.asarray(bias, jnp.float32).reshape(-1)])            # (7,)

    # ---- tile choice: lane-dense, big enough to amortize per-step overhead,
    #      small enough for double-buffered VMEM and >= 2 grid steps on v7x ----
    block_lanes = max(LANE, min(int(block_lanes), 32768))         # <= 256K samples/blk
    if Bg <= LANE:
        tl = Bg                                    # full extent (allowed)
    else:
        tgt = min(block_lanes, -(-Bg // 8))        # aim for >= 8 grid steps
        tl = max(LANE, (tgt // LANE) * LANE)       # 128-lane multiple
    grid_n = -(-Bg // tl)
    bg_pad = grid_n * tl                           # out_shape rounded up; x_r stays ragged

    # Explicit scoped-VMEM budget: one in + one out buffer, x3 for double
    # buffering + headroom; never below the smallest default, capped for v7x.
    blk_bytes = (INPUT_SIZE + 1) * SUBLANE * tl * 4
    vmem_limit = int(min(32 * 1024 * 1024, max(16 * 1024 * 1024, 3 * blk_bytes)))

    out = pl.pallas_call(
        logreg_kernel,
        out_shape=jax.ShapeDtypeStruct((SUBLANE, bg_pad), dtype),
        grid=(grid_n,),
        in_specs=[
            pl.BlockSpec((INPUT_SIZE, SUBLANE, tl), lambda i: (0, 0, i)),
            pl.BlockSpec(memory_space=pltpu.MemorySpace.SMEM),
        ],
        out_specs=pl.BlockSpec((SUBLANE, tl), lambda i: (0, i)),
        compiler_params=pltpu.CompilerParams(
            dimension_semantics=("parallel",),
            vmem_limit_bytes=vmem_limit,
        ),
        cost_estimate=pl.CostEstimate(
            flops=14 * B, transcendentals=B, bytes_accessed=28 * B),
    )(x_r, wb)

    # Drop the rounded-up lane tail (>= Bg) and the >= B batch tail, restore (B, 1).
    # TODO(synk): if the consumer accepts (B,) / (8, B//8), this final slice+reshape
    # pass over the (tiny) output can be dropped entirely.
    return out[:, :Bg].reshape(SUBLANE * Bg)[:B].reshape(B, 1)


if __name__ == "__main__":
    key = jax.random.PRNGKey(0)
    kx, kw, kb = jax.random.split(key, 3)

    batch = 8
    x = jax.random.normal(kx, (batch, INPUT_SIZE), dtype=jnp.float32)

    # torch.nn.Linear(6, 1)-shaped params: weight (1, 6), bias (1,),
    # uniform(-1/sqrt(6), 1/sqrt(6)).
    bound = 1.0 / jnp.sqrt(float(INPUT_SIZE))
    weight = jax.random.uniform(kw, (1, INPUT_SIZE), dtype=jnp.float32,
                                minval=-bound, maxval=bound)
    bias = jax.random.uniform(kb, (1,), dtype=jnp.float32,
                              minval=-bound, maxval=bound)

    out = logistic_regression(x, weight, bias)
    jax.block_until_ready(out)

    # Reference check in plain JAX (tanh-form sigmoid is exact, tight tolerance).
    ref = jax.nn.sigmoid(x @ weight.T + bias)
    assert out.shape == (batch, 1)
    assert jnp.allclose(out, ref, atol=1e-4, rtol=1e-4), \
        f"max abs err {jnp.max(jnp.abs(out - ref))}"

    print("KERNEL_OK")
</pallas_src>

<mosaic_0001>
module attributes {stable_mosaic.version = 11 : i64} {
  func.func @logreg_kernel(%arg0: i32, %arg1: memref<6x8x1xf32, #tpu.memory_space<vmem>>, %arg2: memref<7xf32, #tpu.memory_space<smem>>, %arg3: memref<8x1xf32, #tpu.memory_space<vmem>>) attributes {dimension_semantics = [#tpu.dimension_semantics<parallel>], iteration_bounds = array<i64: 1>, scalar_prefetch = 0 : i64, scratch_operands = 0 : i64, tpu.core_type = #tpu.core_type<tc>, window_params = [{transform_indices = @transform_0, window_bounds = array<i64: 6, 8, 1>}, {transform_indices = @transform_1, window_bounds = array<i64: 7>}, {transform_indices = @transform_2, window_bounds = array<i64: 8, 1>}]} {
    %c0 = arith.constant 0 : index
    %c0_0 = arith.constant 0 : index
    %c0_1 = arith.constant 0 : index
    %0 = vector.load %arg1[%c0, %c0_0, %c0_1] : memref<6x8x1xf32, #tpu.memory_space<vmem>>, vector<1x8x1xf32>
    %1 = vector.shape_cast %0 : vector<1x8x1xf32> to vector<8x1xf32>
    %c0_2 = arith.constant 0 : index
    %2 = memref.load %arg2[%c0_2] : memref<7xf32, #tpu.memory_space<smem>>
    %3 = vector.broadcast %2 : f32 to vector<8x1xf32>
    %4 = arith.mulf %1, %3 : vector<8x1xf32>
    %c1 = arith.constant 1 : index
    %c0_3 = arith.constant 0 : index
    %c0_4 = arith.constant 0 : index
    %5 = vector.load %arg1[%c1, %c0_3, %c0_4] : memref<6x8x1xf32, #tpu.memory_space<vmem>>, vector<1x8x1xf32>
    %6 = vector.shape_cast %5 : vector<1x8x1xf32> to vector<8x1xf32>
    %c1_5 = arith.constant 1 : index
    %7 = memref.load %arg2[%c1_5] : memref<7xf32, #tpu.memory_space<smem>>
    %8 = vector.broadcast %7 : f32 to vector<8x1xf32>
    %9 = arith.mulf %6, %8 : vector<8x1xf32>
    %10 = arith.addf %4, %9 : vector<8x1xf32>
    %c2 = arith.constant 2 : index
    %c0_6 = arith.constant 0 : index
    %c0_7 = arith.constant 0 : index
    %11 = vector.load %arg1[%c2, %c0_6, %c0_7] : memref<6x8x1xf32, #tpu.memory_space<vmem>>, vector<1x8x1xf32>
    %12 = vector.shape_cast %11 : vector<1x8x1xf32> to vector<8x1xf32>
    %c2_8 = arith.constant 2 : index
    %13 = memref.load %arg2[%c2_8] : memref<7xf32, #tpu.memory_space<smem>>
    %14 = vector.broadcast %13 : f32 to vector<8x1xf32>
    %15 = arith.mulf %12, %14 : vector<8x1xf32>
    %16 = arith.addf %10, %15 : vector<8x1xf32>
    %c3 = arith.constant 3 : index
    %c0_9 = arith.constant 0 : index
    %c0_10 = arith.constant 0 : index
    %17 = vector.load %arg1[%c3, %c0_9, %c0_10] : memref<6x8x1xf32, #tpu.memory_space<vmem>>, vector<1x8x1xf32>
    %18 = vector.shape_cast %17 : vector<1x8x1xf32> to vector<8x1xf32>
    %c3_11 = arith.constant 3 : index
    %19 = memref.load %arg2[%c3_11] : memref<7xf32, #tpu.memory_space<smem>>
    %20 = vector.broadcast %19 : f32 to vector<8x1xf32>
    %21 = arith.mulf %18, %20 : vector<8x1xf32>
    %22 = arith.addf %16, %21 : vector<8x1xf32>
    %c4 = arith.constant 4 : index
    %c0_12 = arith.constant 0 : index
    %c0_13 = arith.constant 0 : index
    %23 = vector.load %arg1[%c4, %c0_12, %c0_13] : memref<6x8x1xf32, #tpu.memory_space<vmem>>, vector<1x8x1xf32>
    %24 = vector.shape_cast %23 : vector<1x8x1xf32> to vector<8x1xf32>
    %c4_14 = arith.constant 4 : index
    %25 = memref.load %arg2[%c4_14] : memref<7xf32, #tpu.memory_space<smem>>
    %26 = vector.broadcast %25 : f32 to vector<8x1xf32>
    %27 = arith.mulf %24, %26 : vector<8x1xf32>
    %28 = arith.addf %22, %27 : vector<8x1xf32>
    %c5 = arith.constant 5 : index
    %c0_15 = arith.constant 0 : index
    %c0_16 = arith.constant 0 : index
    %29 = vector.load %arg1[%c5, %c0_15, %c0_16] : memref<6x8x1xf32, #tpu.memory_space<vmem>>, vector<1x8x1xf32>
    %30 = vector.shape_cast %29 : vector<1x8x1xf32> to vector<8x1xf32>
    %c5_17 = arith.constant 5 : index
    %31 = memref.load %arg2[%c5_17] : memref<7xf32, #tpu.memory_space<smem>>
    %32 = vector.broadcast %31 : f32 to vector<8x1xf32>
    %33 = arith.mulf %30, %32 : vector<8x1xf32>
    %34 = arith.addf %28, %33 : vector<8x1xf32>
    %c6 = arith.constant 6 : index
    %35 = memref.load %arg2[%c6] : memref<7xf32, #tpu.memory_space<smem>>
    %36 = vector.broadcast %35 : f32 to vector<8x1xf32>
    %37 = arith.addf %34, %36 : vector<8x1xf32>
    %cst = arith.constant 5.000000e-01 : f32
    %38 = vector.broadcast %cst : f32 to vector<8x1xf32>
    %39 = arith.mulf %38, %37 : vector<8x1xf32>
    %40 = math.tanh %39 : vector<8x1xf32>
    %cst_18 = arith.constant 5.000000e-01 : f32
    %41 = vector.broadcast %cst_18 : f32 to vector<8x1xf32>
    %42 = arith.mulf %41, %40 : vector<8x1xf32>
    %cst_19 = arith.constant 5.000000e-01 : f32
    %43 = vector.broadcast %cst_19 : f32 to vector<8x1xf32>
    %44 = arith.addf %42, %43 : vector<8x1xf32>
    %c0_20 = arith.constant 0 : index
    %c0_21 = arith.constant 0 : index
    %45 = vector.load %arg3[%c0_20, %c0_21] : memref<8x1xf32, #tpu.memory_space<vmem>>, vector<8x1xf32>
    tpu.vector_store %arg3[%c0_20, %c0_21], %44 {strides = array<i32>} : memref<8x1xf32, #tpu.memory_space<vmem>>, vector<8x1xf32>,
    return
  }
  func.func @transform_0(%arg0: i32) -> (i32, i32, i32) {
    %c0_i32 = arith.constant 0 : i32
    %c0_i32_0 = arith.constant 0 : i32
    %c0_i32_1 = arith.constant 0 : i32
    return %c0_i32, %c0_i32_0, %arg0 : i32, i32, i32
  }
  func.func @transform_1(%arg0: i32) -> i32 {
    %c0_i32 = arith.constant 0 : i32
    %c0_i32_0 = arith.constant 0 : i32
    return %c0_i32 : i32
  }
  func.func @transform_2(%arg0: i32) -> (i32, i32) {
    %c0_i32 = arith.constant 0 : i32
    %c0_i32_0 = arith.constant 0 : i32
    return %c0_i32, %arg0 : i32, i32
  }
}

</mosaic_0001>

<llo_original>
// kernel: tpu_custom_call.1
$region0: #{tpu_custom_call.1}
  #allocation0 [shape = 'u32[]', space=smem, size = 0x4, offset = 0x4, fixed_abs, tag = 'smem constant byte address 0x4 - core index']
  #allocation1 [shape = 'u32[72,128]{1,0:T(1,128)}', space=vmem, size = 0x9000, scoped, tag = 'internal scratch']
  %s0 = inlined_call_operand.vmem [shape: f32[6,8,1], index: 0, kind: input, shape index: {}]
  %s1 = inlined_call_operand.vmem [shape: f32[7], index: 1, kind: input, shape index: {}]
  %s2 = inlined_call_operand.vmem [shape: f32[8,1], index: 2, kind: output, shape index: {}]
  %s3 = sld [smem:[#allocation0]]
  $region22: #{tpu_custom_call.1} parent=0
    _
  %s5 = ssub.s32 1, %s3
  %s6 = scalar_select 0, %s5, %s3
  $region1: #{tpu_custom_call.1} parent=0
    #allocation2 [shape = 'u8[512]{0}', space=smem, size = 0x200, scoped, tag = 'input window, operand 1, single buffered']
    #allocation3 [shape = 's32[1]{0}', space=sflag, size = 0x4, scoped, tag = 'scoped memory for tpu_custom_call.1']
    %7 = vsyncpa [#allocation3], 0
    // Predicated region
    $region2: #{tpu_custom_call.1} parent=1 // pred_check
      _
    $region3: #{tpu_custom_call.1} parent=1 // pred_check_branch
      %9 = sbr.rel (0) target = $region5
    $region4: #{tpu_custom_call.1} parent=1 // pred_region
      _
    $region5: #{tpu_custom_call.1} parent=1 // pred_fallthru
      _
    // Predicated region
    $region6: #{tpu_custom_call.1} parent=1 // pred_check
      _
    $region7: #{tpu_custom_call.1} parent=1 // pred_check_branch
      %11 = sbr.rel (0) target = $region9
    $region8: #{tpu_custom_call.1} parent=1 // pred_region
      %13 = vsyncadd [#allocation3], 0
      %s15 = sshll.u32 %s1, 4
      %s16 = int_to_ptr.vmem [resolvable:$true] %s15
      %18 = dma.vmem_to_smem %s16, 16, [#allocation2], [#allocation3]
    $region9: #{tpu_custom_call.1} parent=1 // pred_fallthru
      _
    // Predicated region
    $region10: #{tpu_custom_call.1} parent=1 // pred_check
      _
    $region11: #{tpu_custom_call.1} parent=1 // pred_check_branch
      %20 = sbr.rel (0) target = $region13
    $region12: #{tpu_custom_call.1} parent=1 // pred_region
      %22 = dma.done [#allocation3], 16
    $region13: #{tpu_custom_call.1} parent=1 // pred_fallthru
      _
    %23 = sfence
    %v24 = vld [vmem:[%s0] sm:$0xff]
    %s25 = sld [smem:[#allocation2]]
    %v26 = vstv %s25
    %v27 = vmul.f32 %v24, %v26
    %s28 = scalar_lea.vmem %s0, 8
    %v29 = vld [vmem:[%s28] sm:$0xff]
    %s30 = sld [smem:[#allocation2 + $0x1]]
    %v31 = vstv %s30
    %v32 = vmul.f32 %v29, %v31
    %v33 = vadd.f32 %v27, %v32
    %s34 = scalar_lea.vmem %s0, 16
    %v35 = vld [vmem:[%s34] sm:$0xff]
    %s36 = sld [smem:[#allocation2 + $0x2]]
    %v37 = vstv %s36
    %v38 = vmul.f32 %v35, %v37
    %v39 = vadd.f32 %v33, %v38
    %s40 = scalar_lea.vmem %s0, 24
    %v41 = vld [vmem:[%s40] sm:$0xff]
    %s42 = sld [smem:[#allocation2 + $0x3]]
    %v43 = vstv %s42
    %v44 = vmul.f32 %v41, %v43
    %v45 = vadd.f32 %v39, %v44
    %s46 = scalar_lea.vmem %s0, 32
    %v47 = vld [vmem:[%s46] sm:$0xff]
    %s48 = sld [smem:[#allocation2 + $0x4]]
    %v49 = vstv %s48
    %v50 = vmul.f32 %v47, %v49
    %v51 = vadd.f32 %v45, %v50
    %s52 = scalar_lea.vmem %s0, 40
    %v53 = vld [vmem:[%s52] sm:$0xff]
    %s54 = sld [smem:[#allocation2 + $0x5]]
    %v55 = vstv %s54
    %v56 = vmul.f32 %v53, %v55
    %v57 = vadd.f32 %v51, %v56
    %s58 = sld [smem:[#allocation2 + $0x6]]
    %v59 = vstv %s58
    %v60 = vadd.f32 %v57, %v59
    %v61 = vmul.f32 %v60, 0.5
    %v62 = vtanh.pop %v61
    %v63 = vmul.f32 %v62, 0.5
    %v64 = vadd.f32 %v63, 0.5
    %vm65 = vcmask 7168
    %66 = vst.msk [vmem:[%s2] sm:$0xff] %vm65, %v64
    // Predicated region
    $region14: #{tpu_custom_call.1} parent=1 // pred_check
      _
    $region15: #{tpu_custom_call.1} parent=1 // pred_check_branch
      %68 = sbr.rel (0) target = $region17
    $region16: #{tpu_custom_call.1} parent=1 // pred_region
      _
    $region17: #{tpu_custom_call.1} parent=1 // pred_fallthru
      _
    // Predicated region
    $region18: #{tpu_custom_call.1} parent=1 // pred_check
      _
    $region19: #{tpu_custom_call.1} parent=1 // pred_check_branch
      %70 = sbr.rel (0) target = $region21
    $region20: #{tpu_custom_call.1} parent=1 // pred_region
      _
    $region21: #{tpu_custom_call.1} parent=1 // pred_fallthru
      _
    %71 = vsyncpa [#allocation3], 1

</llo_original>
